<compile_context>
chip_gen: v5e
topology: v5e:2x2
jax: 0.10.0
libtpu: 0.0.40
codegen_flags: <defaults>
</compile_context>

<pallas_src>
import jax
import jax.numpy as jnp
from jax.experimental import pallas as pl
from jax.experimental.pallas import tpu as pltpu

_MiB = 1024 * 1024


def _round_up(x, m):
    return ((x + m - 1) // m) * m


def _vmem_capacity_bytes():
    """Physical VMEM of the local chip; conservative 64 MiB fallback."""
    try:
        info = pltpu.get_tpu_info()
        cap = int(getattr(info, "vmem_capacity_bytes", 0))
        if cap > 0:
            return cap
    except Exception:
        pass
    return 64 * _MiB  # v7x-sized fallback is safe on every generation


def _pick_tiles(bc, hw, itemsize, target_bytes, want_bc_split):
    """(rows, lanes) tile for a (bc, hw) slab, ~target_bytes per buffer.

    lanes tile: multiple of 128 (or the full HW extent); rows tile: multiple of
    8 (or the full BC extent).  `want_bc_split` forces >=2 BC tiles when
    possible so the reduce pass can use both v7x TensorCores."""
    target_elems = max(8 * 128, target_bytes // max(1, itemsize))
    # Lanes first (contiguous HBM within a row -> long DMA bursts).
    if hw <= 128:
        thw = hw
    else:
        thw = min(_round_up(hw, 128),
                  max(128, ((target_elems // 8) // 128) * 128))
        if thw >= hw:
            thw = hw
    # Rows fill the remaining budget.
    tbc = max(8, (target_elems // max(thw, 1)) // 8 * 8)
    if want_bc_split and bc >= 16:
        tbc = min(tbc, _round_up(pl.cdiv(bc, 2), 8))
    if tbc >= bc:
        tbc = bc
    return tbc, thw


# ------------------- fully fused single-kernel fast path --------------------

def _make_fused_kernel(batch, chan, inv_hw):
    """x resident in VMEM: pool -> FC -> sigmoid -> scale, one HBM read of x.

    The FC is done per batch on (C,1) column vectors so the channel dim never
    has to move between lanes and sublanes (no in-kernel relayout)."""

    def kernel(x_ref, w1_ref, b1_ref, w2_ref, b2_ref, o_ref):
        for bi in range(batch):                       # static unroll, batch is small here
            r0 = bi * chan
            xs = x_ref[r0:r0 + chan, :].astype(jnp.float32)          # (C, HW)
            p = jnp.sum(xs, axis=-1, keepdims=True) * inv_hw         # (C, 1) mean
            h = jnp.dot(w1_ref[...], p,
                        preferred_element_type=jnp.float32) + b1_ref[...]
            h = jnp.maximum(h, 0.0)                                   # (hidden, 1)
            g = jnp.dot(w2_ref[...], h,
                        preferred_element_type=jnp.float32) + b2_ref[...]
            g = jax.nn.sigmoid(g)                                     # (C, 1)
            o_ref[r0:r0 + chan, :] = (xs * g).astype(o_ref.dtype)

    return kernel


# --------------------- pass 1: streamed global sum --------------------------

def _make_pool_kernel(hw, thw, n_hw):
    needs_mask = (hw % thw) != 0          # static: ragged HW tail only

    def kernel(x_ref, sum_ref):
        j = pl.program_id(1)              # HW (reduction) axis

        @pl.when(j == 0)
        def _init():
            sum_ref[...] = jnp.zeros_like(sum_ref)

        x = x_ref[...].astype(jnp.float32)

        if needs_mask:
            is_last = j == (n_hw - 1)

            @pl.when(jnp.logical_not(is_last))
            def _acc_full():
                sum_ref[...] += jnp.sum(x, axis=-1, keepdims=True)

            @pl.when(is_last)                          # mask only the last tile
            def _acc_masked():
                lane = jax.lax.broadcasted_iota(jnp.int32, x.shape, 1)
                xm = jnp.where((j * thw + lane) < hw, x, 0.0)
                sum_ref[...] += jnp.sum(xm, axis=-1, keepdims=True)
        else:
            sum_ref[...] += jnp.sum(x, axis=-1, keepdims=True)

    return kernel


# --------------------- pass 2: streamed channel-wise scale ------------------

def _scale_kernel(x_ref, gate_ref, o_ref):
    # gate_ref is (tbc, 1): lane-broadcast, multiply in the source dtype.
    o_ref[...] = x_ref[...] * gate_ref[...]


# --------------------- wrapper ------------------------------------------------

def channel_att(x_nchw, w1, b1, w2, b2, *,
                force_tiled=False, pool_tile=None, scale_tile=None):
    """x_nchw: (B, C, H, W).
    w1: (hidden, C), b1: (hidden,), w2: (C, hidden), b2: (C,)  (PyTorch Linear).
    Returns (B, C, H, W) in x's dtype."""
    b, c, h, w = x_nchw.shape
    bc, hw = b * c, h * w

    x2 = x_nchw.reshape(bc, hw)                 # free reshape, source dtype kept
    dt = x2.dtype
    itemsize = jnp.dtype(dt).itemsize

    cap = _vmem_capacity_bytes()
    vmem_limit = max(32 * _MiB, int(cap * 0.7))   # ~45 MiB v7x / ~90 MiB v5e,v6e

    # ---------------- fused fast path: x (+ out + f32 temp) fits VMEM -------
    bytes_x = bc * hw * itemsize
    slice_f32 = c * hw * 4                        # one batch's f32 working slice
    fused_pref = max(12 * _MiB, cap // 5)         # ~12.8 MiB v7x, ~25.6 MiB v5e/v6e
    fused_est = 2 * bytes_x + 2 * slice_f32
    use_fused = ((not force_tiled) and b <= 32 and
                 bytes_x <= fused_pref and fused_est <= int(0.85 * vmem_limit))

    if use_fused:
        w1c = jnp.asarray(w1, jnp.float32)                    # (hidden, C)
        b1c = jnp.asarray(b1, jnp.float32).reshape(-1, 1)     # (hidden, 1)
        w2c = jnp.asarray(w2, jnp.float32)                    # (C, hidden)
        b2c = jnp.asarray(b2, jnp.float32).reshape(-1, 1)     # (C, 1)
        out2 = pl.pallas_call(
            _make_fused_kernel(b, c, 1.0 / float(hw)),
            out_shape=jax.ShapeDtypeStruct((bc, hw), dt),
            in_specs=[pl.BlockSpec(memory_space=pltpu.MemorySpace.VMEM)] * 5,
            out_specs=pl.BlockSpec(memory_space=pltpu.MemorySpace.VMEM),
            compiler_params=pltpu.CompilerParams(vmem_limit_bytes=vmem_limit),
        )(x2, w1c, b1c, w2c, b2c)
        return out2.reshape(b, c, h, w)

    # ---------------- streaming path for large x ----------------------------
    p1_target = min(8 * _MiB, vmem_limit // 4)    # pass 1: 2 double-buffered slabs
    p2_target = min(6 * _MiB, vmem_limit // 8)    # pass 2: 4 double-buffered slabs
    tbc1, thw1 = pool_tile if pool_tile is not None else _pick_tiles(
        bc, hw, itemsize, p1_target, want_bc_split=True)
    tbc2, thw2 = scale_tile if scale_tile is not None else _pick_tiles(
        bc, hw, itemsize, p2_target, want_bc_split=False)
    n_bc1, n_hw1 = pl.cdiv(bc, tbc1), pl.cdiv(hw, thw1)
    n_bc2, n_hw2 = pl.cdiv(bc, tbc2), pl.cdiv(hw, thw2)

    # pass 1: masked global sum over HW, BC tiles split across TensorCores.
    pooled_sum = pl.pallas_call(
        _make_pool_kernel(hw, thw1, n_hw1),
        out_shape=jax.ShapeDtypeStruct((bc, 1), jnp.float32),
        grid=(n_bc1, n_hw1),
        in_specs=[pl.BlockSpec((tbc1, thw1), lambda i, j: (i, j))],
        out_specs=pl.BlockSpec((tbc1, 1), lambda i, j: (i, 0)),
        compiler_params=pltpu.CompilerParams(
            dimension_semantics=("parallel", "arbitrary"),
            vmem_limit_bytes=vmem_limit),
    )(x2)

    # Tiny FC gate (<0.1% of work) as XLA glue.
    # TODO(synk): fold this into pass 1's epilogue once BC-tiled reduces can see
    # the whole (B, C) pooled vector; with BC tiling a tile only holds a subset
    # of channels, so the cross-channel FC cannot run per-tile.  The fused fast
    # path above already removes this glue for the latency-sensitive sizes.
    w1f = jnp.asarray(w1, jnp.float32)
    b1f = jnp.asarray(b1, jnp.float32)
    w2f = jnp.asarray(w2, jnp.float32)
    b2f = jnp.asarray(b2, jnp.float32)
    pooled = pooled_sum.reshape(b, c) * (1.0 / float(hw))
    hid = jnp.maximum(pooled @ w1f.T + b1f[None, :], 0.0)
    gate = jax.nn.sigmoid(hid @ w2f.T + b2f[None, :])           # (B, C) f32
    gate_col = gate.reshape(bc, 1).astype(dt)                   # scale in x dtype

    # pass 2: channel-wise scale, fully parallel streaming pass.
    # TODO(synk): add input_output_aliases={0: 0} here if the caller can donate x.
    out2 = pl.pallas_call(
        _scale_kernel,
        out_shape=jax.ShapeDtypeStruct((bc, hw), dt),
        grid=(n_bc2, n_hw2),
        in_specs=[pl.BlockSpec((tbc2, thw2), lambda i, j: (i, j)),   # x tile
                  pl.BlockSpec((tbc2, 1), lambda i, j: (i, 0))],     # resident gate
        out_specs=pl.BlockSpec((tbc2, thw2), lambda i, j: (i, j)),
        compiler_params=pltpu.CompilerParams(
            dimension_semantics=("parallel", "parallel"),
            vmem_limit_bytes=vmem_limit),
    )(x2, gate_col)

    return out2.reshape(b, c, h, w)


def _reference(x, w1, b1, w2, b2):
    # Pure-JAX reference mirroring the PyTorch forward.
    y = jnp.mean(x.astype(jnp.float32), axis=(2, 3))            # (B, C)
    y = jnp.maximum(y @ w1.T + b1, 0.0)
    y = jax.nn.sigmoid(y @ w2.T + b2)
    return (x.astype(jnp.float32) * y[:, :, None, None]).astype(x.dtype)


if __name__ == "__main__":
    key = jax.random.PRNGKey(0)
    k = jax.random.split(key, 10)

    # Case 1: module config ChannelAtt(channel=4, reduction=2) -> hidden = 2.
    # Small x -> fully fused single-kernel path.
    B, C, H, W = 2, 4, 16, 16
    hidden = C // 2
    x = jax.random.normal(k[0], (B, C, H, W), dtype=jnp.float32)
    w1 = jax.random.normal(k[1], (hidden, C), dtype=jnp.float32) * 0.3
    b1 = jax.random.normal(k[2], (hidden,), dtype=jnp.float32) * 0.1
    w2 = jax.random.normal(k[3], (C, hidden), dtype=jnp.float32) * 0.3
    b2 = jax.random.normal(k[4], (C,), dtype=jnp.float32) * 0.1

    out = jax.block_until_ready(channel_att(x, w1, b1, w2, b2))
    ref = _reference(x, w1, b1, w2, b2)
    assert out.shape == (B, C, H, W)
    assert jnp.allclose(out, ref, atol=1e-5, rtol=1e-5), "fused path mismatch"

    # Case 2: force the streaming path with tiny tiles so the reduce
    # accumulator, ragged-HW mask and BC tiling are exercised as well.
    B, C, H, W = 2, 8, 24, 20        # HW = 480 -> ragged vs 128-lane tiles
    hidden = C // 2
    x = jax.random.normal(k[5], (B, C, H, W), dtype=jnp.float32)
    w1 = jax.random.normal(k[6], (hidden, C), dtype=jnp.float32) * 0.3
    b1 = jax.random.normal(k[7], (hidden,), dtype=jnp.float32) * 0.1
    w2 = jax.random.normal(k[8], (C, hidden), dtype=jnp.float32) * 0.3
    b2 = jax.random.normal(k[9], (C,), dtype=jnp.float32) * 0.1

    out = jax.block_until_ready(
        channel_att(x, w1, b1, w2, b2, force_tiled=True,
                    pool_tile=(8, 128), scale_tile=(8, 128)))
    ref = _reference(x, w1, b1, w2, b2)
    assert jnp.allclose(out, ref, atol=1e-5, rtol=1e-5), "tiled path mismatch"

    print("KERNEL_OK")
</pallas_src>

<mosaic_0001>
module attributes {stable_mosaic.version = 11 : i64} {
  func.func @kernel(%arg0: memref<8x256xf32, #tpu.memory_space<vmem>>, %arg1: memref<2x4xf32, #tpu.memory_space<vmem>>, %arg2: memref<2x1xf32, #tpu.memory_space<vmem>>, %arg3: memref<4x2xf32, #tpu.memory_space<vmem>>, %arg4: memref<4x1xf32, #tpu.memory_space<vmem>>, %arg5: memref<8x256xf32, #tpu.memory_space<vmem>>) attributes {dimension_semantics = [], scalar_prefetch = 0 : i64, scratch_operands = 0 : i64, tpu.core_type = #tpu.core_type<tc>} {
    %c0 = arith.constant 0 : index
    %c0_0 = arith.constant 0 : index
    %0 = vector.load %arg0[%c0, %c0_0] : memref<8x256xf32, #tpu.memory_space<vmem>>, vector<4x256xf32>
    %cst = arith.constant dense<0.000000e+00> : vector<4xf32>
    %1 = vector.multi_reduction <add>, %0, %cst [1] : vector<4x256xf32> to vector<4xf32>
    %2 = vector.shape_cast %1 : vector<4xf32> to vector<4x1xf32>
    %cst_1 = arith.constant 3.906250e-03 : f32
    %3 = vector.broadcast %cst_1 : f32 to vector<4x1xf32>
    %4 = arith.mulf %2, %3 : vector<4x1xf32>
    %c0_2 = arith.constant 0 : index
    %c0_3 = arith.constant 0 : index
    %5 = vector.load %arg1[%c0_2, %c0_3] : memref<2x4xf32, #tpu.memory_space<vmem>>, vector<2x4xf32>
    %cst_4 = arith.constant dense<0.000000e+00> : vector<2x1xf32>
    %6 = tpu.matmul %5, %4, %cst_4 {dimension_numbers = #tpu.dot_dimension_numbers<[1], [0], [0], [1], [0, 0, 1, 1], [], []>} : vector<2x4xf32>, vector<4x1xf32>, vector<2x1xf32> -> vector<2x1xf32>
    %c0_5 = arith.constant 0 : index
    %c0_6 = arith.constant 0 : index
    %7 = vector.load %arg2[%c0_5, %c0_6] : memref<2x1xf32, #tpu.memory_space<vmem>>, vector<2x1xf32>
    %8 = arith.addf %6, %7 : vector<2x1xf32>
    %cst_7 = arith.constant 0.000000e+00 : f32
    %9 = vector.broadcast %cst_7 : f32 to vector<2x1xf32>
    %10 = arith.maximumf %8, %9 : vector<2x1xf32>
    %c0_8 = arith.constant 0 : index
    %c0_9 = arith.constant 0 : index
    %11 = vector.load %arg3[%c0_8, %c0_9] : memref<4x2xf32, #tpu.memory_space<vmem>>, vector<4x2xf32>
    %cst_10 = arith.constant dense<0.000000e+00> : vector<4x1xf32>
    %12 = tpu.matmul %11, %10, %cst_10 {dimension_numbers = #tpu.dot_dimension_numbers<[1], [0], [0], [1], [0, 0, 1, 1], [], []>} : vector<4x2xf32>, vector<2x1xf32>, vector<4x1xf32> -> vector<4x1xf32>
    %c0_11 = arith.constant 0 : index
    %c0_12 = arith.constant 0 : index
    %13 = vector.load %arg4[%c0_11, %c0_12] : memref<4x1xf32, #tpu.memory_space<vmem>>, vector<4x1xf32>
    %14 = arith.addf %12, %13 : vector<4x1xf32>
    %15 = arith.negf %14 : vector<4x1xf32>
    %16 = math.exp %15 : vector<4x1xf32>
    %cst_13 = arith.constant 1.000000e+00 : f32
    %17 = vector.broadcast %cst_13 : f32 to vector<4x1xf32>
    %18 = arith.addf %17, %16 : vector<4x1xf32>
    %19 = arith.divf %17, %18 : vector<4x1xf32>
    %20 = vector.broadcast %19 : vector<4x1xf32> to vector<4x256xf32>
    %21 = arith.mulf %0, %20 : vector<4x256xf32>
    %c0_14 = arith.constant 0 : index
    %c0_15 = arith.constant 0 : index
    %22 = vector.load %arg5[%c0_14, %c0_15] : memref<8x256xf32, #tpu.memory_space<vmem>>, vector<4x256xf32>
    tpu.vector_store %arg5[%c0_14, %c0_15], %21 {strides = array<i32>} : memref<8x256xf32, #tpu.memory_space<vmem>>, vector<4x256xf32>,
    %c4 = arith.constant 4 : index
    %c0_16 = arith.constant 0 : index
    %23 = vector.load %arg0[%c4, %c0_16] : memref<8x256xf32, #tpu.memory_space<vmem>>, vector<4x256xf32>
    %cst_17 = arith.constant dense<0.000000e+00> : vector<4xf32>
    %24 = vector.multi_reduction <add>, %23, %cst_17 [1] : vector<4x256xf32> to vector<4xf32>
    %25 = vector.shape_cast %24 : vector<4xf32> to vector<4x1xf32>
    %cst_18 = arith.constant 3.906250e-03 : f32
    %26 = vector.broadcast %cst_18 : f32 to vector<4x1xf32>
    %27 = arith.mulf %25, %26 : vector<4x1xf32>
    %c0_19 = arith.constant 0 : index
    %c0_20 = arith.constant 0 : index
    %28 = vector.load %arg1[%c0_19, %c0_20] : memref<2x4xf32, #tpu.memory_space<vmem>>, vector<2x4xf32>
    %cst_21 = arith.constant dense<0.000000e+00> : vector<2x1xf32>
    %29 = tpu.matmul %28, %27, %cst_21 {dimension_numbers = #tpu.dot_dimension_numbers<[1], [0], [0], [1], [0, 0, 1, 1], [], []>} : vector<2x4xf32>, vector<4x1xf32>, vector<2x1xf32> -> vector<2x1xf32>
    %c0_22 = arith.constant 0 : index
    %c0_23 = arith.constant 0 : index
    %30 = vector.load %arg2[%c0_22, %c0_23] : memref<2x1xf32, #tpu.memory_space<vmem>>, vector<2x1xf32>
    %31 = arith.addf %29, %30 : vector<2x1xf32>
    %cst_24 = arith.constant 0.000000e+00 : f32
    %32 = vector.broadcast %cst_24 : f32 to vector<2x1xf32>
    %33 = arith.maximumf %31, %32 : vector<2x1xf32>
    %c0_25 = arith.constant 0 : index
    %c0_26 = arith.constant 0 : index
    %34 = vector.load %arg3[%c0_25, %c0_26] : memref<4x2xf32, #tpu.memory_space<vmem>>, vector<4x2xf32>
    %cst_27 = arith.constant dense<0.000000e+00> : vector<4x1xf32>
    %35 = tpu.matmul %34, %33, %cst_27 {dimension_numbers = #tpu.dot_dimension_numbers<[1], [0], [0], [1], [0, 0, 1, 1], [], []>} : vector<4x2xf32>, vector<2x1xf32>, vector<4x1xf32> -> vector<4x1xf32>
    %c0_28 = arith.constant 0 : index
    %c0_29 = arith.constant 0 : index
    %36 = vector.load %arg4[%c0_28, %c0_29] : memref<4x1xf32, #tpu.memory_space<vmem>>, vector<4x1xf32>
    %37 = arith.addf %35, %36 : vector<4x1xf32>
    %38 = arith.negf %37 : vector<4x1xf32>
    %39 = math.exp %38 : vector<4x1xf32>
    %cst_30 = arith.constant 1.000000e+00 : f32
    %40 = vector.broadcast %cst_30 : f32 to vector<4x1xf32>
    %41 = arith.addf %40, %39 : vector<4x1xf32>
    %42 = arith.divf %40, %41 : vector<4x1xf32>
    %43 = vector.broadcast %42 : vector<4x1xf32> to vector<4x256xf32>
    %44 = arith.mulf %23, %43 : vector<4x256xf32>
    %c4_31 = arith.constant 4 : index
    %c0_32 = arith.constant 0 : index
    %45 = vector.load %arg5[%c4_31, %c0_32] : memref<8x256xf32, #tpu.memory_space<vmem>>, vector<4x256xf32>
    tpu.vector_store %arg5[%c4_31, %c0_32], %44 {strides = array<i32>} : memref<8x256xf32, #tpu.memory_space<vmem>>, vector<4x256xf32>,
    return
  }
}

</mosaic_0001>

<llo_original>
// kernel: tpu_custom_call.1
$region0: #{tpu_custom_call.1}
  #allocation0 [shape = 'u32[]', space=smem, size = 0x4, offset = 0x4, fixed_abs, tag = 'smem constant byte address 0x4 - core index']
  #allocation1 [shape = 'u32[72,128]{1,0:T(1,128)}', space=vmem, size = 0x9000, scoped, tag = 'internal scratch']
  %s0 = inlined_call_operand.hbm [shape: f32[8,256], index: 0, kind: input, shape index: {}]
  %s1 = inlined_call_operand.vmem [shape: f32[2,4], index: 1, kind: input, shape index: {}]
  %s2 = inlined_call_operand.vmem [shape: f32[2,1], index: 2, kind: input, shape index: {}]
  %s3 = inlined_call_operand.vmem [shape: f32[4,2], index: 3, kind: input, shape index: {}]
  %s4 = inlined_call_operand.vmem [shape: f32[4,1], index: 4, kind: input, shape index: {}]
  %s5 = inlined_call_operand.hbm [shape: f32[8,256], index: 5, kind: output, shape index: {}]
  %s6 = sld [smem:[#allocation0]]
  $region34: #{tpu_custom_call.1} parent=0
    _
  %s8 = ssub.s32 1, %s6
  %s9 = scalar_select 0, %s8, %s6
  $region1: #{tpu_custom_call.1} parent=0
    #allocation2 [shape = 'u8[8192]{0}', space=vmem, size = 0x2000, scoped, tag = 'input window, operand 0, single buffered']
    #allocation3 [shape = 's32[1]{0}', space=sflag, size = 0x4, scoped, tag = 'scoped memory for tpu_custom_call.1']
    #allocation4 [shape = 's32[1]{0}', space=sflag, size = 0x4, scoped, tag = 'scoped memory for tpu_custom_call.1']
    #allocation5 [shape = 'u8[8192]{0}', space=vmem, size = 0x2000, scoped, tag = 'output window, operand 0, single buffered']
    %10 = vsyncpa [#allocation3], 0
    %11 = vsyncpa [#allocation4], 0
    // Predicated region
    $region2: #{tpu_custom_call.1} parent=1 // pred_check
      _
    $region3: #{tpu_custom_call.1} parent=1 // pred_check_branch
      %13 = sbr.rel (0) target = $region5
    $region4: #{tpu_custom_call.1} parent=1 // pred_region
      %15 = vsyncadd [#allocation3], 0
      %s17 = sshll.u32 %s0, 4
      %s18 = int_to_ptr.hbm [resolvable:$true] %s17
      %s19 = sshll.u32 [#allocation2], 4
      %s20 = int_to_ptr.vmem [resolvable:$true] %s19
      %22 = dma.hbm_to_vmem [thread:$0]  %s18, 256, %s20, [#allocation3]
    $region5: #{tpu_custom_call.1} parent=1 // pred_fallthru
      _
    // Predicated region
    $region6: #{tpu_custom_call.1} parent=1 // pred_check
      _
    $region7: #{tpu_custom_call.1} parent=1 // pred_check_branch
      %24 = sbr.rel (0) target = $region9
    $region8: #{tpu_custom_call.1} parent=1 // pred_region
      _
    $region9: #{tpu_custom_call.1} parent=1 // pred_fallthru
      _
    // Predicated region
    $region10: #{tpu_custom_call.1} parent=1 // pred_check
      _
    $region11: #{tpu_custom_call.1} parent=1 // pred_check_branch
      %26 = sbr.rel (0) target = $region13
    $region12: #{tpu_custom_call.1} parent=1 // pred_region
      _
    $region13: #{tpu_custom_call.1} parent=1 // pred_fallthru
      _
    // Predicated region
    $region14: #{tpu_custom_call.1} parent=1 // pred_check
      _
    $region15: #{tpu_custom_call.1} parent=1 // pred_check_branch
      %28 = sbr.rel (0) target = $region17
    $region16: #{tpu_custom_call.1} parent=1 // pred_region
      _
    $region17: #{tpu_custom_call.1} parent=1 // pred_fallthru
      _
    // Predicated region
    $region18: #{tpu_custom_call.1} parent=1 // pred_check
      _
    $region19: #{tpu_custom_call.1} parent=1 // pred_check_branch
      %30 = sbr.rel (0) target = $region21
    $region20: #{tpu_custom_call.1} parent=1 // pred_region
      _
    $region21: #{tpu_custom_call.1} parent=1 // pred_fallthru
      _
    // Predicated region
    $region22: #{tpu_custom_call.1} parent=1 // pred_check
      _
    $region23: #{tpu_custom_call.1} parent=1 // pred_check_branch
      %32 = sbr.rel (0) target = $region25
    $region24: #{tpu_custom_call.1} parent=1 // pred_region
      %34 = dma.done [#allocation3], 256
    $region25: #{tpu_custom_call.1} parent=1 // pred_fallthru
      _
    %v35 = vld [vmem:[#allocation2] sm:$0xf]
    %v36 = vld [vmem:[#allocation2 + $0x8] sm:$0xf]
    %vm37 = vcmask 1043456
    %v38 = vsel %vm37, %v35, 0.0
    %v39 = vsel %vm37, %v36, 0.0
    %v40 = vadd.f32 %v38, %v39
    %41 = vadd.xlane.f32.xlu0 %v40
    %v42 = vpop.xlane.xlu0 %41
    %v43 = vmul.f32 %v42, 0.00390625
    %v44 = vld [vmem:[%s1] sm:$0x3]
    %v45 = vld [vmem:[%s2] sm:$0x3]
    %vm46 = vcmask 31744
    %v48 = vsel %vm46, %v44, 0
    %v51 = vsel %vm37, %v43, 0
    %53 = vmatpush.msra.mxu0 0.0
    %54 = vmatpush.msra.mxu0 0.0
    %55 = vmatpush.msra.mxu0 0.0
    %56 = vmatpush.msra.mxu0 0.0
    %57 = vmatpush.msra.mxu0 0.0
    %58 = vmatpush.msra.mxu0 0.0
    %59 = vmatpush.msra.mxu0 0.0
    %60 = vmatpush.msra.mxu0 0.0
    %61 = vmatpush.msra.mxu0 0.0
    %62 = vmatpush.msra.mxu0 0.0
    %63 = vmatpush.msra.mxu0 0.0
    %64 = vmatpush.msra.mxu0 0.0
    %65 = vmatpush.msra.mxu0 0.0
    %66 = vmatpush.msra.mxu0 0.0
    %67 = vmatpush.msra.mxu0 0.0
    %68 = vmatpush.msra.mxu0 %v51
    %69 = vmatmul.f32.gmra.mxu0 %v48
    %v70 = vpop.f32.mrf.mxu0
    %v71 = vadd.f32 %v45, %v70
    %72 = vdwg.mxu0
    %v73 = vmax.f32 %v71, 0.0
    %v74 = vld [vmem:[%s3] sm:$0xf]
    %v75 = vld [vmem:[%s4] sm:$0xf]
    %vm76 = vcmask 15360
    %v78 = vsel %vm76, %v74, 0
    %vm80 = vcmask 1041408
    %v82 = vsel %vm80, %v73, 0
    %84 = vmatpush.msra.mxu0 0.0
    %85 = vmatpush.msra.mxu0 0.0
    %86 = vmatpush.msra.mxu0 0.0
    %87 = vmatpush.msra.mxu0 0.0
    %88 = vmatpush.msra.mxu0 0.0
    %89 = vmatpush.msra.mxu0 0.0
    %90 = vmatpush.msra.mxu0 0.0
    %91 = vmatpush.msra.mxu0 0.0
    %92 = vmatpush.msra.mxu0 0.0
    %93 = vmatpush.msra.mxu0 0.0
    %94 = vmatpush.msra.mxu0 0.0
    %95 = vmatpush.msra.mxu0 0.0
    %96 = vmatpush.msra.mxu0 0.0
    %97 = vmatpush.msra.mxu0 0.0
    %98 = vmatpush.msra.mxu0 0.0
    %99 = vmatpush.msra.mxu0 %v82
    %100 = vmatmul.f32.gmra.mxu0 %v78
    %v101 = vpop.f32.mrf.mxu0
    %v102 = vadd.f32 %v75, %v101
    %103 = vdwg.mxu0
    %v104 = vxor.u32 %v102, 2147483648
    %v105 = vmul.f32 %v104, 1.442695
    %v106 = vpow.pop %v105
    %v107 = vadd.f32 %v106, 1.0
    %v108 = vrcp.pop %v107
    %v109 = vmul.f32 %v107, %v108
    %v110 = vsub.f32 1.0, %v109
    %v111 = vmul.f32 %v108, %v110
    %v112 = vadd.f32 %v108, %v111
    %vm113 = vweird.f32 %v107
    %vm114 = vweird.f32 %v108
    %vm115 = vmor %vm113, %vm114
    %v116 = vsel %vm115, %v108, %v112
    %v117 = vand.u32 2147483647, %v107
    %vm118 = vcmp.eq.f32.partialorder %v117, 8.507059e+37
    %v119 = vand.u32 %v107, 2147483648
    %v120 = vor.u32 1.1754944e-38, %v119
    %v121 = vsel %vm118, %v120, %v116
    %v122 = vmul.f32 1.0, %v121
    %124 = vset.pattern.permute.xlu0 0
    %125 = vperm.xlu0 %124, %v122
    %v126 = vpop.permute.xlu0 %125
    %v128 = vmul.f32 %v35, %v126
    %v129 = vmul.f32 %v36, %v126
    %130 = vst [vmem:[#allocation5] sm:$0xf] %v128
    %131 = vst [vmem:[#allocation5 + $0x8] sm:$0xf] %v129
    %v132 = vld [vmem:[#allocation2] sm:$0xf0]
    %v133 = vld [vmem:[#allocation2 + $0x8] sm:$0xf0]
    %vm134 = vcmask 1047556
    %v135 = vsel %vm134, %v132, 0.0
    %v136 = vsel %vm134, %v133, 0.0
    %v137 = vadd.f32 %v135, %v136
    %138 = vadd.xlane.f32.xlu0 %v137
    %v139 = vpop.xlane.xlu0 %138
    %v140 = vmul.f32 %v139, 0.00390625
    %v141 = vld [vmem:[%s1] sm:$0x3]
    %v142 = vld [vmem:[%s2] sm:$0x3]
    %v144 = vrot.slane %v140, 4
    %v146 = vsel %vm46, %v141, 0
    %v148 = vsel %vm37, %v144, 0
    %150 = vmatpush.msra.mxu0 0.0
    %151 = vmatpush.msra.mxu0 0.0
    %152 = vmatpush.msra.mxu0 0.0
    %153 = vmatpush.msra.mxu0 0.0
    %154 = vmatpush.msra.mxu0 0.0
    %155 = vmatpush.msra.mxu0 0.0
    %156 = vmatpush.msra.mxu0 0.0
    %157 = vmatpush.msra.mxu0 0.0
    %158 = vmatpush.msra.mxu0 0.0
    %159 = vmatpush.msra.mxu0 0.0
    %160 = vmatpush.msra.mxu0 0.0
    %161 = vmatpush.msra.mxu0 0.0
    %162 = vmatpush.msra.mxu0 0.0
    %163 = vmatpush.msra.mxu0 0.0
    %164 = vmatpush.msra.mxu0 0.0
    %165 = vmatpush.msra.mxu0 %v148
    %166 = vmatmul.f32.gmra.mxu0 %v146
    %v167 = vpop.f32.mrf.mxu0
    %v168 = vadd.f32 %v142, %v167
    %169 = vdwg.mxu0
    %v170 = vmax.f32 %v168, 0.0
    %v171 = vld [vmem:[%s3] sm:$0xf]
    %v172 = vld [vmem:[%s4] sm:$0xf]
    %v174 = vsel %vm76, %v171, 0
    %v177 = vsel %vm80, %v170, 0
    %179 = vmatpush.msra.mxu0 0.0
    %180 = vmatpush.msra.mxu0 0.0
    %181 = vmatpush.msra.mxu0 0.0
    %182 = vmatpush.msra.mxu0 0.0
    %183 = vmatpush.msra.mxu0 0.0
    %184 = vmatpush.msra.mxu0 0.0
    %185 = vmatpush.msra.mxu0 0.0
    %186 = vmatpush.msra.mxu0 0.0
    %187 = vmatpush.msra.mxu0 0.0
    %188 = vmatpush.msra.mxu0 0.0
    %189 = vmatpush.msra.mxu0 0.0
    %190 = vmatpush.msra.mxu0 0.0
    %191 = vmatpush.msra.mxu0 0.0
    %192 = vmatpush.msra.mxu0 0.0
    %193 = vmatpush.msra.mxu0 0.0
    %194 = vmatpush.msra.mxu0 %v177
    %195 = vmatmul.f32.gmra.mxu0 %v174
    %v196 = vpop.f32.mrf.mxu0
    %v197 = vadd.f32 %v172, %v196
    %198 = vdwg.mxu0
    %v199 = vxor.u32 %v197, 2147483648
    %v200 = vmul.f32 %v199, 1.442695
    %v201 = vpow.pop %v200
    %v202 = vadd.f32 %v201, 1.0
    %v203 = vrcp.pop %v202
    %v204 = vmul.f32 %v202, %v203
    %v205 = vsub.f32 1.0, %v204
    %v206 = vmul.f32 %v203, %v205
    %v207 = vadd.f32 %v203, %v206
    %vm208 = vweird.f32 %v202
    %vm209 = vweird.f32 %v203
    %vm210 = vmor %vm208, %vm209
    %v211 = vsel %vm210, %v203, %v207
    %v212 = vand.u32 2147483647, %v202
    %vm213 = vcmp.eq.f32.partialorder %v212, 8.507059e+37
    %v214 = vand.u32 %v202, 2147483648
    %v215 = vor.u32 1.1754944e-38, %v214
    %v216 = vsel %vm213, %v215, %v211
    %v217 = vmul.f32 1.0, %v216
    %219 = vset.pattern.permute.xlu0 0
    %220 = vperm.xlu0 %219, %v217
    %v221 = vpop.permute.xlu0 %220
    %v222 = vrot.slane %v221, 4
    %v224 = vmul.f32 %v132, %v222
    %v225 = vmul.f32 %v133, %v222
    %226 = vst [vmem:[#allocation5] sm:$0xf0] %v224
    %227 = vst [vmem:[#allocation5 + $0x8] sm:$0xf0] %v225
    // Predicated region
    $region26: #{tpu_custom_call.1} parent=1 // pred_check
      _
    $region27: #{tpu_custom_call.1} parent=1 // pred_check_branch
      %229 = sbr.rel (0) target = $region29
    $region28: #{tpu_custom_call.1} parent=1 // pred_region
      %231 = vsyncadd [#allocation4], 0
      %s233 = sshll.u32 [#allocation5], 4
      %s234 = int_to_ptr.vmem [resolvable:$true] %s233
      %s235 = sshll.u32 %s5, 4
      %s236 = int_to_ptr.hbm [resolvable:$true] %s235
      %238 = dma.vmem_to_hbm [thread:$0]  %s234, 256, %s236, [#allocation4]
    $region29: #{tpu_custom_call.1} parent=1 // pred_fallthru
      _
    // Predicated region
    $region30: #{tpu_custom_call.1} parent=1 // pred_check
      _
    $region31: #{tpu_custom_call.1} parent=1 // pred_check_branch
      %240 = sbr.rel (0) target = $region33
    $region32: #{tpu_custom_call.1} parent=1 // pred_region
      %242 = dma.done [#allocation4], 256
    $region33: #{tpu_custom_call.1} parent=1 // pred_fallthru
      _
    %243 = vsyncpa [#allocation3], 1
    %244 = vsyncpa [#allocation4], 1

</llo_original>
